<compile_context>
chip_gen: v7x
topology: tpu7x:2x2x1
jax: 0.10.0
libtpu: 0.0.40
codegen_flags: <defaults>
</compile_context>

<pallas_src>
import functools
import math

import jax
import jax.numpy as jnp
from jax.experimental import pallas as pl
from jax.experimental.pallas import tpu as pltpu


# ----------------------------------------------------------------------------
# Pallas kernel: entire PoseTransitionNetwork forward (5 fused matmuls)
# ----------------------------------------------------------------------------
def pose_mlp_kernel(p_ref, u_ref,
                    w1p_ref, w1u_ref, w2_ref, w3_ref, w4_ref, w5_ref,
                    b_ref, out_ref, *, k):
    f32 = jnp.float32
    p = p_ref[...].astype(f32)                      # (B, 6k)
    u = u_ref[...].astype(f32)                      # (B, action_dim)

    # Packed biases: row 0 = [b1a | b1b], row 1 = [b2a | b2b],
    #                row 2 = b1ab, row 3 = b2ab, row 4 = b3ab.
    b1 = b_ref[0:1, 0:256]
    b2 = b_ref[1:2, 0:512]
    b3 = b_ref[2:3, 0:128]
    b4 = b_ref[3:4, 0:64]
    b5 = b_ref[4:5, 0:6 * k]

    # h1 = [Fc1_a(p) | Fc1_b(u)]   (W1p / W1u are column-block padded)
    h1 = (jnp.dot(p, w1p_ref[...], preferred_element_type=f32)
          + jnp.dot(u, w1u_ref[...], preferred_element_type=f32) + b1)
    # h2 = [Fc2_a(.) | Fc2_b(.)] == torch.cat((p_enc, u_enc), dim=-1)
    h2 = jnp.dot(h1, w2_ref[...], preferred_element_type=f32) + b2
    h3 = jnp.dot(h2, w3_ref[...], preferred_element_type=f32) + b3   # Fc1_ab
    h4 = jnp.dot(h3, w4_ref[...], preferred_element_type=f32) + b4   # Fc2_ab
    out = jnp.dot(h4, w5_ref[...], preferred_element_type=f32) + b5  # Fc3_ab
    out_ref[...] = out.astype(out_ref.dtype)


def pose_transition_forward(packed, poses, action, k):
    """delta_poses = PoseTransitionNetwork(poses, action).  Single pallas_call."""
    vmem = pl.BlockSpec(memory_space=pltpu.MemorySpace.VMEM)
    B = poses.shape[0]
    args = (poses, action,
            packed["W1p"], packed["W1u"], packed["W2"],
            packed["W3"], packed["W4"], packed["W5"], packed["B"])
    return pl.pallas_call(
        functools.partial(pose_mlp_kernel, k=k),
        out_shape=jax.ShapeDtypeStruct((B, 6 * k), jnp.float32),
        in_specs=[vmem] * len(args),
        out_specs=vmem,
    )(*args)


# ----------------------------------------------------------------------------
# Parameter init (PyTorch nn.Linear default: U(-1/sqrt(in_f), +1/sqrt(in_f))),
# weights pre-transposed to (in_features, out_features).
# ----------------------------------------------------------------------------
def _linear(key, in_f, out_f):
    k1, k2 = jax.random.split(key)
    bound = 1.0 / math.sqrt(in_f)
    W = jax.random.uniform(k1, (in_f, out_f), jnp.float32, -bound, bound)
    b = jax.random.uniform(k2, (out_f,), jnp.float32, -bound, bound)
    return W, b


def init_params(key, k, action_dim):
    keys = jax.random.split(key, 7)
    return {
        "fc1a": _linear(keys[0], 6 * k, 128),
        "fc2a": _linear(keys[1], 128, 256),
        "fc1b": _linear(keys[2], action_dim, 128),
        "fc2b": _linear(keys[3], 128, 256),
        "fc1ab": _linear(keys[4], 512, 128),
        "fc2ab": _linear(keys[5], 128, 64),
        "fc3ab": _linear(keys[6], 64, 6 * k),
    }


def pack_params(params, k, action_dim):
    """Fold the two branches + concat into block-padded matrices, pack biases."""
    w1a, b1a = params["fc1a"]
    w2a, b2a = params["fc2a"]
    w1b, b1b = params["fc1b"]
    w2b, b2b = params["fc2b"]
    w1ab, b1ab = params["fc1ab"]
    w2ab, b2ab = params["fc2ab"]
    w3ab, b3ab = params["fc3ab"]

    W1p = jnp.zeros((6 * k, 256), jnp.float32).at[:, :128].set(w1a)
    W1u = jnp.zeros((action_dim, 256), jnp.float32).at[:, 128:].set(w1b)
    W2 = (jnp.zeros((256, 512), jnp.float32)
          .at[:128, :256].set(w2a)
          .at[128:, 256:].set(w2b))
    Bpack = (jnp.zeros((8, 512), jnp.float32)
             .at[0, :256].set(jnp.concatenate([b1a, b1b]))
             .at[1, :512].set(jnp.concatenate([b2a, b2b]))
             .at[2, :128].set(b1ab)
             .at[3, :64].set(b2ab)
             .at[4, :6 * k].set(b3ab))
    return {"W1p": W1p, "W1u": W1u, "W2": W2,
            "W3": w1ab, "W4": w2ab, "W5": w3ab, "B": Bpack}


# ----------------------------------------------------------------------------
# Pure-JAX reference (mirrors the PyTorch forward exactly) for verification.
# ----------------------------------------------------------------------------
def pose_transition_reference(params, poses, action):
    w1a, b1a = params["fc1a"]
    w2a, b2a = params["fc2a"]
    w1b, b1b = params["fc1b"]
    w2b, b2b = params["fc2b"]
    w1ab, b1ab = params["fc1ab"]
    w2ab, b2ab = params["fc2ab"]
    w3ab, b3ab = params["fc3ab"]
    p_enc = (poses @ w1a + b1a) @ w2a + b2a
    u_enc = (action @ w1b + b1b) @ w2b + b2b
    l = jnp.concatenate([p_enc, u_enc], axis=-1)
    return ((l @ w1ab + b1ab) @ w2ab + b2ab) @ w3ab + b3ab


if __name__ == "__main__":
    k_obj = 2          # number of objects k  -> pose vector of 6k = 12
    action_dim = 4
    batch = 1          # module contract: poses (1, 6k), action (1, action_dim)

    root = jax.random.PRNGKey(0)
    kp, kpose, kact = jax.random.split(root, 3)

    params = init_params(kp, k_obj, action_dim)
    packed = pack_params(params, k_obj, action_dim)

    poses = jax.random.uniform(kpose, (batch, 6 * k_obj), jnp.float32)
    action = jax.random.uniform(kact, (batch, action_dim), jnp.float32)

    delta_poses = pose_transition_forward(packed, poses, action, k_obj)
    jax.block_until_ready(delta_poses)

    ref = pose_transition_reference(params, poses, action)
    assert delta_poses.shape == (batch, 6 * k_obj)
    assert jnp.allclose(delta_poses, ref, rtol=1e-4, atol=1e-4), (
        f"max abs err {float(jnp.max(jnp.abs(delta_poses - ref)))}")
    print("KERNEL_OK")
</pallas_src>

<mosaic_0001>
module attributes {stable_mosaic.version = 11 : i64} {
  func.func @pose_mlp_kernel(%arg0: memref<1x12xf32, #tpu.memory_space<vmem>>, %arg1: memref<1x4xf32, #tpu.memory_space<vmem>>, %arg2: memref<12x256xf32, #tpu.memory_space<vmem>>, %arg3: memref<4x256xf32, #tpu.memory_space<vmem>>, %arg4: memref<256x512xf32, #tpu.memory_space<vmem>>, %arg5: memref<512x128xf32, #tpu.memory_space<vmem>>, %arg6: memref<128x64xf32, #tpu.memory_space<vmem>>, %arg7: memref<64x12xf32, #tpu.memory_space<vmem>>, %arg8: memref<8x512xf32, #tpu.memory_space<vmem>>, %arg9: memref<1x12xf32, #tpu.memory_space<vmem>>) attributes {dimension_semantics = [], scalar_prefetch = 0 : i64, scratch_operands = 0 : i64, tpu.core_type = #tpu.core_type<tc>} {
    %c0 = arith.constant 0 : index
    %c0_0 = arith.constant 0 : index
    %0 = vector.load %arg0[%c0, %c0_0] : memref<1x12xf32, #tpu.memory_space<vmem>>, vector<1x12xf32>
    %c0_1 = arith.constant 0 : index
    %c0_2 = arith.constant 0 : index
    %1 = vector.load %arg1[%c0_1, %c0_2] : memref<1x4xf32, #tpu.memory_space<vmem>>, vector<1x4xf32>
    %c0_3 = arith.constant 0 : index
    %c0_4 = arith.constant 0 : index
    %2 = vector.load %arg8[%c0_3, %c0_4] : memref<8x512xf32, #tpu.memory_space<vmem>>, vector<1x256xf32>
    %c1 = arith.constant 1 : index
    %c0_5 = arith.constant 0 : index
    %3 = vector.load %arg8[%c1, %c0_5] : memref<8x512xf32, #tpu.memory_space<vmem>>, vector<1x512xf32>
    %c2 = arith.constant 2 : index
    %c0_6 = arith.constant 0 : index
    %4 = vector.load %arg8[%c2, %c0_6] : memref<8x512xf32, #tpu.memory_space<vmem>>, vector<1x128xf32>
    %c3 = arith.constant 3 : index
    %c0_7 = arith.constant 0 : index
    %5 = vector.load %arg8[%c3, %c0_7] : memref<8x512xf32, #tpu.memory_space<vmem>>, vector<1x64xf32>
    %c4 = arith.constant 4 : index
    %c0_8 = arith.constant 0 : index
    %6 = vector.load %arg8[%c4, %c0_8] : memref<8x512xf32, #tpu.memory_space<vmem>>, vector<1x12xf32>
    %c0_9 = arith.constant 0 : index
    %c0_10 = arith.constant 0 : index
    %7 = vector.load %arg2[%c0_9, %c0_10] : memref<12x256xf32, #tpu.memory_space<vmem>>, vector<12x256xf32>
    %cst = arith.constant dense<0.000000e+00> : vector<1x256xf32>
    %8 = tpu.matmul %0, %7, %cst {dimension_numbers = #tpu.dot_dimension_numbers<[1], [0], [0], [1], [0, 0, 1, 1], [], []>} : vector<1x12xf32>, vector<12x256xf32>, vector<1x256xf32> -> vector<1x256xf32>
    %c0_11 = arith.constant 0 : index
    %c0_12 = arith.constant 0 : index
    %9 = vector.load %arg3[%c0_11, %c0_12] : memref<4x256xf32, #tpu.memory_space<vmem>>, vector<4x256xf32>
    %cst_13 = arith.constant dense<0.000000e+00> : vector<1x256xf32>
    %10 = tpu.matmul %1, %9, %cst_13 {dimension_numbers = #tpu.dot_dimension_numbers<[1], [0], [0], [1], [0, 0, 1, 1], [], []>} : vector<1x4xf32>, vector<4x256xf32>, vector<1x256xf32> -> vector<1x256xf32>
    %11 = arith.addf %8, %10 : vector<1x256xf32>
    %12 = arith.addf %11, %2 : vector<1x256xf32>
    %c0_14 = arith.constant 0 : index
    %c0_15 = arith.constant 0 : index
    %13 = vector.load %arg4[%c0_14, %c0_15] : memref<256x512xf32, #tpu.memory_space<vmem>>, vector<256x512xf32>
    %cst_16 = arith.constant dense<0.000000e+00> : vector<1x512xf32>
    %14 = tpu.matmul %12, %13, %cst_16 {dimension_numbers = #tpu.dot_dimension_numbers<[1], [0], [0], [1], [0, 0, 1, 1], [], []>} : vector<1x256xf32>, vector<256x512xf32>, vector<1x512xf32> -> vector<1x512xf32>
    %15 = arith.addf %14, %3 : vector<1x512xf32>
    %c0_17 = arith.constant 0 : index
    %c0_18 = arith.constant 0 : index
    %16 = vector.load %arg5[%c0_17, %c0_18] : memref<512x128xf32, #tpu.memory_space<vmem>>, vector<512x128xf32>
    %cst_19 = arith.constant dense<0.000000e+00> : vector<1x128xf32>
    %17 = tpu.matmul %15, %16, %cst_19 {dimension_numbers = #tpu.dot_dimension_numbers<[1], [0], [0], [1], [0, 0, 1, 1], [], []>} : vector<1x512xf32>, vector<512x128xf32>, vector<1x128xf32> -> vector<1x128xf32>
    %18 = arith.addf %17, %4 : vector<1x128xf32>
    %c0_20 = arith.constant 0 : index
    %c0_21 = arith.constant 0 : index
    %19 = vector.load %arg6[%c0_20, %c0_21] : memref<128x64xf32, #tpu.memory_space<vmem>>, vector<128x64xf32>
    %cst_22 = arith.constant dense<0.000000e+00> : vector<1x64xf32>
    %20 = tpu.matmul %18, %19, %cst_22 {dimension_numbers = #tpu.dot_dimension_numbers<[1], [0], [0], [1], [0, 0, 1, 1], [], []>} : vector<1x128xf32>, vector<128x64xf32>, vector<1x64xf32> -> vector<1x64xf32>
    %21 = arith.addf %20, %5 : vector<1x64xf32>
    %c0_23 = arith.constant 0 : index
    %c0_24 = arith.constant 0 : index
    %22 = vector.load %arg7[%c0_23, %c0_24] : memref<64x12xf32, #tpu.memory_space<vmem>>, vector<64x12xf32>
    %cst_25 = arith.constant dense<0.000000e+00> : vector<1x12xf32>
    %23 = tpu.matmul %21, %22, %cst_25 {dimension_numbers = #tpu.dot_dimension_numbers<[1], [0], [0], [1], [0, 0, 1, 1], [], []>} : vector<1x64xf32>, vector<64x12xf32>, vector<1x12xf32> -> vector<1x12xf32>
    %24 = arith.addf %23, %6 : vector<1x12xf32>
    %c0_26 = arith.constant 0 : index
    %c0_27 = arith.constant 0 : index
    %25 = vector.load %arg9[%c0_26, %c0_27] : memref<1x12xf32, #tpu.memory_space<vmem>>, vector<1x12xf32>
    tpu.vector_store %arg9[%c0_26, %c0_27], %24 {strides = array<i32>} : memref<1x12xf32, #tpu.memory_space<vmem>>, vector<1x12xf32>,
    return
  }
}

</mosaic_0001>

<llo_original>
// kernel: tpu_custom_call.1
$region0: #{tpu_custom_call.1}
  #allocation0 [shape = 'u32[]', space=smem, size = 0x4, offset = 0x4, fixed_abs, tag = 'smem constant byte address 0x4 - core index']
  #allocation1 [shape = 'u32[144,128]{1,0:T(1,128)}', space=vmem, size = 0x12000, scoped, tag = 'internal scratch']
  %s0 = inlined_call_operand.vmem [shape: f32[1,12], index: 0, kind: input, shape index: {}]
  %s1 = inlined_call_operand.vmem [shape: f32[1,4], index: 1, kind: input, shape index: {}]
  %s2 = inlined_call_operand.vmem [shape: f32[12,256], index: 2, kind: input, shape index: {}]
  %s3 = inlined_call_operand.vmem [shape: f32[4,256], index: 3, kind: input, shape index: {}]
  %s4 = inlined_call_operand.hbm [shape: f32[256,512], index: 4, kind: input, shape index: {}]
  %s5 = inlined_call_operand.hbm [shape: f32[512,128], index: 5, kind: input, shape index: {}]
  %s6 = inlined_call_operand.vmem [shape: f32[128,64], index: 6, kind: input, shape index: {}]
  %s7 = inlined_call_operand.vmem [shape: f32[64,12], index: 7, kind: input, shape index: {}]
  %s8 = inlined_call_operand.vmem [shape: f32[8,512], index: 8, kind: input, shape index: {}]
  %s9 = inlined_call_operand.hbm [shape: f32[1,12], index: 9, kind: output, shape index: {}]
  %s10 = sld [smem:[#allocation0]]
  $region54: #{tpu_custom_call.1} parent=0
    _
  %s12 = ssub.s32 1, %s10
  %s13 = scalar_select 0, %s12, %s10
  $region1: #{tpu_custom_call.1} parent=0
    #allocation2 [shape = 'u8[524288]{0}', space=vmem, size = 0x80000, scoped, tag = 'input window, operand 4, single buffered']
    #allocation3 [shape = 's32[1]{0}', space=sflag, size = 0x4, scoped, tag = 'scoped memory for tpu_custom_call.1']
    #allocation4 [shape = 's32[1]{0}', space=sflag, size = 0x4, scoped, tag = 'scoped memory for tpu_custom_call.1']
    #allocation5 [shape = 'u8[262144]{0}', space=vmem, size = 0x40000, scoped, tag = 'input window, operand 5, single buffered']
    #allocation6 [shape = 's32[1]{0}', space=sflag, size = 0x4, scoped, tag = 'scoped memory for tpu_custom_call.1']
    #allocation7 [shape = 'u8[512]{0}', space=vmem, size = 0x400, scoped, tag = 'output window, operand 0, single buffered']
    %14 = vsyncpa [#allocation3], 0
    %15 = vsyncpa [#allocation6], 0
    %16 = vsyncpa [#allocation4], 0
    // Predicated region
    $region2: #{tpu_custom_call.1} parent=1 // pred_check
      _
    $region3: #{tpu_custom_call.1} parent=1 // pred_check_branch
      %18 = sbr.rel (0) target = $region5
    $region4: #{tpu_custom_call.1} parent=1 // pred_region
      _
    $region5: #{tpu_custom_call.1} parent=1 // pred_fallthru
      _
    // Predicated region
    $region6: #{tpu_custom_call.1} parent=1 // pred_check
      _
    $region7: #{tpu_custom_call.1} parent=1 // pred_check_branch
      %20 = sbr.rel (0) target = $region9
    $region8: #{tpu_custom_call.1} parent=1 // pred_region
      _
    $region9: #{tpu_custom_call.1} parent=1 // pred_fallthru
      _
    // Predicated region
    $region10: #{tpu_custom_call.1} parent=1 // pred_check
      _
    $region11: #{tpu_custom_call.1} parent=1 // pred_check_branch
      %22 = sbr.rel (0) target = $region13
    $region12: #{tpu_custom_call.1} parent=1 // pred_region
      _
    $region13: #{tpu_custom_call.1} parent=1 // pred_fallthru
      _
    // Predicated region
    $region14: #{tpu_custom_call.1} parent=1 // pred_check
      _
    $region15: #{tpu_custom_call.1} parent=1 // pred_check_branch
      %24 = sbr.rel (0) target = $region17
    $region16: #{tpu_custom_call.1} parent=1 // pred_region
      _
    $region17: #{tpu_custom_call.1} parent=1 // pred_fallthru
      _
    // Predicated region
    $region18: #{tpu_custom_call.1} parent=1 // pred_check
      _
    $region19: #{tpu_custom_call.1} parent=1 // pred_check_branch
      %26 = sbr.rel (0) target = $region21
    $region20: #{tpu_custom_call.1} parent=1 // pred_region
      %s28 = ssub.s32 16384, 16384
      %29 = vsyncadd [#allocation3], %s28
      %s30 = sshll.u32 [#allocation2], 4
      %s31 = int_to_ptr.vmem [resolvable:$true] %s30
      %36 = dma.hbm_to_vmem [thread:$0]  %s4, 16384, %s31, [#allocation3], 512, 512, 32
    $region21: #{tpu_custom_call.1} parent=1 // pred_fallthru
      _
    // Predicated region
    $region22: #{tpu_custom_call.1} parent=1 // pred_check
      _
    $region23: #{tpu_custom_call.1} parent=1 // pred_check_branch
      %38 = sbr.rel (0) target = $region25
    $region24: #{tpu_custom_call.1} parent=1 // pred_region
      %s40 = ssub.s32 8192, 8192
      %41 = vsyncadd [#allocation6], %s40
      %s42 = sshll.u32 [#allocation5], 4
      %s43 = int_to_ptr.vmem [resolvable:$true] %s42
      %48 = dma.hbm_to_vmem [thread:$0]  %s5, 8192, %s43, [#allocation6], 128, 128, 8
    $region25: #{tpu_custom_call.1} parent=1 // pred_fallthru
      _
    // Predicated region
    $region26: #{tpu_custom_call.1} parent=1 // pred_check
      _
    $region27: #{tpu_custom_call.1} parent=1 // pred_check_branch
      %50 = sbr.rel (0) target = $region29
    $region28: #{tpu_custom_call.1} parent=1 // pred_region
      _
    $region29: #{tpu_custom_call.1} parent=1 // pred_fallthru
      _
    // Predicated region
    $region30: #{tpu_custom_call.1} parent=1 // pred_check
      _
    $region31: #{tpu_custom_call.1} parent=1 // pred_check_branch
      %52 = sbr.rel (0) target = $region33
    $region32: #{tpu_custom_call.1} parent=1 // pred_region
      _
    $region33: #{tpu_custom_call.1} parent=1 // pred_fallthru
      _
    // Predicated region
    $region34: #{tpu_custom_call.1} parent=1 // pred_check
      _
    $region35: #{tpu_custom_call.1} parent=1 // pred_check_branch
      %54 = sbr.rel (0) target = $region37
    $region36: #{tpu_custom_call.1} parent=1 // pred_region
      _
    $region37: #{tpu_custom_call.1} parent=1 // pred_fallthru
      _
    // Predicated region
    $region38: #{tpu_custom_call.1} parent=1 // pred_check
      _
    $region39: #{tpu_custom_call.1} parent=1 // pred_check_branch
      %56 = sbr.rel (0) target = $region41
    $region40: #{tpu_custom_call.1} parent=1 // pred_region
      %57 = dma.done [#allocation3], 16384
    $region41: #{tpu_custom_call.1} parent=1 // pred_fallthru
      _
    // Predicated region
    $region42: #{tpu_custom_call.1} parent=1 // pred_check
      _
    $region43: #{tpu_custom_call.1} parent=1 // pred_check_branch
      %59 = sbr.rel (0) target = $region45
    $region44: #{tpu_custom_call.1} parent=1 // pred_region
      %60 = dma.done [#allocation6], 8192
    $region45: #{tpu_custom_call.1} parent=1 // pred_fallthru
      _
    %v61 = vld [vmem:[%s0] sm:$0x1]
    %v62 = vld [vmem:[%s1] sm:$0x1]
    %v63 = vld [vmem:[%s8] ss:$8 sm:$0x3]
    %s64 = scalar_lea.vmem %s8, 1
    %v65 = vld [vmem:[%s64] ss:$8 sm:$0xf]
    %v66 = vld [vmem:[%s8 + $0x2] ss:$0 sm:$0xff]
    %v67 = vld [vmem:[%s8 + $0x3] ss:$0 sm:$0xff]
    %v68 = vld [vmem:[%s8 + $0x4] ss:$0 sm:$0xff]
    %v69 = vld [vmem:[%s2] sm:$0xff]
    %v70 = vld [vmem:[%s2 + $0x8] sm:$0xff]
    %v71 = vld [vmem:[%s2 + $0x10] sm:$0xf]
    %v72 = vld [vmem:[%s2 + $0x18] sm:$0xf]
    %v73 = vld [vmem:[%s3] sm:$0xff]
    %v75 = vcombine.high %v73, %v73
    %vm76 = vcmask 31744
    %v78 = vsel %vm76, %v62, 0
    %vm80 = vcmask 1043456
    %v81 = vsel %vm80, %v73, 0
    %v83 = vsel %vm80, %v75, 0
    %85 = vmatprep.subr.mxu0 %v83
    %86 = vmatpush1.msra.mxu0 %v81
    %87 = vmatprep.subr.mxu0 0.0
    %88 = vmatpush1.msra.mxu0 0.0
    %89 = vmatprep.subr.mxu0 0.0
    %90 = vmatpush1.msra.mxu0 0.0
    %91 = vmatprep.subr.mxu0 0.0
    %92 = vmatpush1.msra.mxu0 0.0
    %93 = vmatprep.subr.mxu0 0.0
    %94 = vmatpush1.msra.mxu0 0.0
    %95 = vmatprep.subr.mxu0 0.0
    %96 = vmatpush1.msra.mxu0 0.0
    %97 = vmatprep.subr.mxu0 0.0
    %98 = vmatpush1.msra.mxu0 0.0
    %99 = vmatprep.subr.mxu0 0.0
    %100 = vmatpush1.msra.mxu0 0.0
    %101 = vmatprep.subr.mxu0 0.0
    %102 = vmatpush1.msra.mxu0 0.0
    %103 = vmatprep.subr.mxu0 0.0
    %104 = vmatpush1.msra.mxu0 0.0
    %105 = vmatprep.subr.mxu0 0.0
    %106 = vmatpush1.msra.mxu0 0.0
    %107 = vmatprep.subr.mxu0 0.0
    %108 = vmatpush1.msra.mxu0 0.0
    %109 = vmatprep.subr.mxu0 0.0
    %110 = vmatpush1.msra.mxu0 0.0
    %111 = vmatprep.subr.mxu0 0.0
    %112 = vmatpush1.msra.mxu0 0.0
    %113 = vmatprep.subr.mxu0 0.0
    %114 = vmatpush1.msra.mxu0 0.0
    %115 = vmatprep.subr.mxu0 0.0
    %116 = vmatpush1.msra.mxu0 0.0
    %117 = vmatprep.subr.mxu0 0.0
    %118 = vmatpush1.msra.mxu0 0.0
    %119 = vmatprep.subr.mxu0 0.0
    %120 = vmatpush1.msra.mxu0 0.0
    %121 = vmatprep.subr.mxu0 0.0
    %122 = vmatpush1.msra.mxu0 0.0
    %123 = vmatprep.subr.mxu0 0.0
    %124 = vmatpush1.msra.mxu0 0.0
    %125 = vmatprep.subr.mxu0 0.0
    %126 = vmatpush1.msra.mxu0 0.0
    %127 = vmatprep.subr.mxu0 0.0
    %128 = vmatpush1.msra.mxu0 0.0
    %129 = vmatprep.subr.mxu0 0.0
    %130 = vmatpush1.msra.mxu0 0.0
    %131 = vmatprep.subr.mxu0 0.0
    %132 = vmatpush1.msra.mxu0 0.0
    %133 = vmatprep.subr.mxu0 0.0
    %134 = vmatpush1.msra.mxu0 0.0
    %135 = vmatprep.subr.mxu0 0.0
    %136 = vmatpush1.msra.mxu0 0.0
    %137 = vmatprep.subr.mxu0 0.0
    %138 = vmatpush1.msra.mxu0 0.0
    %139 = vmatprep.subr.mxu0 0.0
    %140 = vmatpush1.msra.mxu0 0.0
    %141 = vmatprep.subr.mxu0 0.0
    %142 = vmatpush1.msra.mxu0 0.0
    %143 = vmatprep.subr.mxu0 0.0
    %144 = vmatpush1.msra.mxu0 0.0
    %145 = vmatprep.subr.mxu0 0.0
    %146 = vmatpush1.msra.mxu0 0.0
    %147 = vmatprep.subr.mxu0 0.0
    %148 = vmatpush1.msra.mxu0 0.0
    %149 = vmatprep.mubr.f32.mxu0 0.0
    %150 = vmatmul.mubr.f32.gmra.mrb[0].mxu0 %v78
    %v151 = vpop.f32.mrb[0].mxu0
    %v152 = vadd.f32 0.0, %v151
    %v153 = vpop.f32.mrb[0].mxu0
    %v154 = vadd.f32 0.0, %v153
    %155 = vdwg.mxu0
    %vm156 = vcmask 97280
    %v158 = vsel %vm156, %v61, 0
    %v161 = vsel %vm80, %v71, 0
    %v164 = vsel %vm80, %v72, 0
    %166 = vmatprep.subr.mxu0 %v70
    %167 = vmatpush1.msra.mxu0 %v69
    %168 = vmatprep.subr.mxu0 %v164
    %169 = vmatpush1.msra.mxu0 %v161
    %170 = vmatprep.subr.mxu0 0.0
    %171 = vmatpush1.msra.mxu0 0.0
    %172 = vmatprep.subr.mxu0 0.0
    %173 = vmatpush1.msra.mxu0 0.0
    %174 = vmatprep.subr.mxu0 0.0
    %175 = vmatpush1.msra.mxu0 0.0
    %176 = vmatprep.subr.mxu0 0.0
    %177 = vmatpush1.msra.mxu0 0.0
    %178 = vmatprep.subr.mxu0 0.0
    %179 = vmatpush1.msra.mxu0 0.0
    %180 = vmatprep.subr.mxu0 0.0
    %181 = vmatpush1.msra.mxu0 0.0
    %182 = vmatprep.subr.mxu0 0.0
    %183 = vmatpush1.msra.mxu0 0.0
    %184 = vmatprep.subr.mxu0 0.0
    %185 = vmatpush1.msra.mxu0 0.0
    %186 = vmatprep.subr.mxu0 0.0
    %187 = vmatpush1.msra.mxu0 0.0
    %188 = vmatprep.subr.mxu0 0.0
    %189 = vmatpush1.msra.mxu0 0.0
    %190 = vmatprep.subr.mxu0 0.0
    %191 = vmatpush1.msra.mxu0 0.0
    %192 = vmatprep.subr.mxu0 0.0
    %193 = vmatpush1.msra.mxu0 0.0
    %194 = vmatprep.subr.mxu0 0.0
    %195 = vmatpush1.msra.mxu0 0.0
    %196 = vmatprep.subr.mxu0 0.0
    %197 = vmatpush1.msra.mxu0 0.0
    %198 = vmatprep.subr.mxu0 0.0
    %199 = vmatpush1.msra.mxu0 0.0
    %200 = vmatprep.subr.mxu0 0.0
    %201 = vmatpush1.msra.mxu0 0.0
    %202 = vmatprep.subr.mxu0 0.0
    %203 = vmatpush1.msra.mxu0 0.0
    %204 = vmatprep.subr.mxu0 0.0
    %205 = vmatpush1.msra.mxu0 0.0
    %206 = vmatprep.subr.mxu0 0.0
    %207 = vmatpush1.msra.mxu0 0.0
    %208 = vmatprep.subr.mxu0 0.0
    %209 = vmatpush1.msra.mxu0 0.0
    %210 = vmatprep.subr.mxu0 0.0
    %211 = vmatpush1.msra.mxu0 0.0
    %212 = vmatprep.subr.mxu0 0.0
    %213 = vmatpush1.msra.mxu0 0.0
    %214 = vmatprep.subr.mxu0 0.0
    %215 = vmatpush1.msra.mxu0 0.0
    %216 = vmatprep.subr.mxu0 0.0
    %217 = vmatpush1.msra.mxu0 0.0
    %218 = vmatprep.subr.mxu0 0.0
    %219 = vmatpush1.msra.mxu0 0.0
    %220 = vmatprep.subr.mxu0 0.0
    %221 = vmatpush1.msra.mxu0 0.0
    %222 = vmatprep.subr.mxu0 0.0
    %223 = vmatpush1.msra.mxu0 0.0
    %224 = vmatprep.subr.mxu0 0.0
    %225 = vmatpush1.msra.mxu0 0.0
    %226 = vmatprep.subr.mxu0 0.0
    %227 = vmatpush1.msra.mxu0 0.0
    %228 = vmatprep.subr.mxu0 0.0
    %229 = vmatpush1.msra.mxu0 0.0
    %230 = vmatprep.mubr.f32.mxu0 0.0
    %231 = vmatmul.mubr.f32.gmra.mrb[0].mxu0 %v158
    %v232 = vpop.f32.mrb[0].mxu0
    %v233 = vadd.f32 %v152, %v232
    %v234 = vpop.f32.mrb[0].mxu0
    %v235 = vadd.f32 %v154, %v234
    %236 = vdwg.mxu0
    %v238 = vlaneseq
    %v239 = vshrl.u32 %v238, 7
    %v240 = vsub.s32 0, %v239
    %v241 = vrot.slane %v63, %v240
    %v242 = vlaneseq
    %v243 = vshrl.u32 %v242, 7
    %v244 = vsub.s32 1, %v243
    %v245 = vrot.slane %v63, %v244
    %v248 = vadd.f32 %v233, %v241
    %v249 = vadd.f32 %v235, %v245
    %v250 = vld [vmem:[#allocation2] sm:$0xff]
    %v251 = vld [vmem:[#allocation2 + $0x8] sm:$0xff]
    %v252 = vld [vmem:[#allocation2 + $0x10] sm:$0xff]
    %v253 = vld [vmem:[#allocation2 + $0x18] sm:$0xff]
    %v254 = vld [vmem:[#allocation2 + $0x20] sm:$0xff]
    %v255 = vld [vmem:[#allocation2 + $0x28] sm:$0xff]
    %v256 = vld [vmem:[#allocation2 + $0x30] sm:$0xff]
    %v257 = vld [vmem:[#allocation2 + $0x38] sm:$0xff]
    %v258 = vld [vmem:[#allocation2 + $0x40] sm:$0xff]
    %v259 = vld [vmem:[#allocation2 + $0x48] sm:$0xff]
    %v260 = vld [vmem:[#allocation2 + $0x50] sm:$0xff]
    %v261 = vld [vmem:[#allocation2 + $0x58] sm:$0xff]
    %v262 = vld [vmem:[#allocation2 + $0x60] sm:$0xff]
    %v263 = vld [vmem:[#allocation2 + $0x68] sm:$0xff]
    %v264 = vld [vmem:[#allocation2 + $0x70] sm:$0xff]
    %v265 = vld [vmem:[#allocation2 + $0x78] sm:$0xff]
    %v266 = vld [vmem:[#allocation2 + $0x80] sm:$0xff]
    %v267 = vld [vmem:[#allocation2 + $0x88] sm:$0xff]
    %v268 = vld [vmem:[#allocation2 + $0x90] sm:$0xff]
    %v269 = vld [vmem:[#allocation2 + $0x98] sm:$0xff]
    %v270 = vld [vmem:[#allocation2 + $0xa0] sm:$0xff]
    %v271 = vld [vmem:[#allocation2 + $0xa8] sm:$0xff]
    %v272 = vld [vmem:[#allocation2 + $0xb0] sm:$0xff]
    %v273 = vld [vmem:[#allocation2 + $0xb8] sm:$0xff]
    %v274 = vld [vmem:[#allocation2 + $0xc0] sm:$0xff]
    %v275 = vld [vmem:[#allocation2 + $0xc8] sm:$0xff]
    %v276 = vld [vmem:[#allocation2 + $0xd0] sm:$0xff]
    %v277 = vld [vmem:[#allocation2 + $0xd8] sm:$0xff]
    %v278 = vld [vmem:[#allocation2 + $0xe0] sm:$0xff]
    %v279 = vld [vmem:[#allocation2 + $0xe8] sm:$0xff]
    %v280 = vld [vmem:[#allocation2 + $0xf0] sm:$0xff]
    %v281 = vld [vmem:[#allocation2 + $0xf8] sm:$0xff]
    %v282 = vld [vmem:[#allocation2 + $0x100] sm:$0xff]
    %v283 = vld [vmem:[#allocation2 + $0x108] sm:$0xff]
    %v284 = vld [vmem:[#allocation2 + $0x110] sm:$0xff]
    %v285 = vld [vmem:[#allocation2 + $0x118] sm:$0xff]
    %v286 = vld [vmem:[#allocation2 + $0x120] sm:$0xff]
    %v287 = vld [vmem:[#allocation2 + $0x128] sm:$0xff]
    %v288 = vld [vmem:[#allocation2 + $0x130] sm:$0xff]
    %v289 = vld [vmem:[#allocation2 + $0x138] sm:$0xff]
    %v290 = vld [vmem:[#allocation2 + $0x140] sm:$0xff]
    %v291 = vld [vmem:[#allocation2 + $0x148] sm:$0xff]
    %v292 = vld [vmem:[#allocation2 + $0x150] sm:$0xff]
    %v293 = vld [vmem:[#allocation2 + $0x158] sm:$0xff]
    %v294 = vld [vmem:[#allocation2 + $0x160] sm:$0xff]
    %v295 = vld [vmem:[#allocation2 + $0x168] sm:$0xff]
    %v296 = vld [vmem:[#allocation2 + $0x170] sm:$0xff]
    %v297 = vld [vmem:[#allocation2 + $0x178] sm:$0xff]
    %v298 = vld [vmem:[#allocation2 + $0x180] sm:$0xff]
    %v299 = vld [vmem:[#allocation2 + $0x188] sm:$0xff]
    %v300 = vld [vmem:[#allocation2 + $0x190] sm:$0xff]
    %v301 = vld [vmem:[#allocation2 + $0x198] sm:$0xff]
    %v302 = vld [vmem:[#allocation2 + $0x1a0] sm:$0xff]
    %v303 = vld [vmem:[#allocation2 + $0x1a8] sm:$0xff]
    %v304 = vld [vmem:[#allocation2 + $0x1b0] sm:$0xff]
    %v305 = vld [vmem:[#allocation2 + $0x1b8] sm:$0xff]
    %v306 = vld [vmem:[#allocation2 + $0x1c0] sm:$0xff]
    %v307 = vld [vmem:[#allocation2 + $0x1c8] sm:$0xff]
    %v308 = vld [vmem:[#allocation2 + $0x1d0] sm:$0xff]
    %v309 = vld [vmem:[#allocation2 + $0x1d8] sm:$0xff]
    %v310 = vld [vmem:[#allocation2 + $0x1e0] sm:$0xff]
    %v311 = vld [vmem:[#allocation2 + $0x1e8] sm:$0xff]
    %v312 = vld [vmem:[#allocation2 + $0x1f0] sm:$0xff]
    %v313 = vld [vmem:[#allocation2 + $0x1f8] sm:$0xff]
    %v314 = vld [vmem:[#allocation2 + $0x200] sm:$0xff]
    %v315 = vld [vmem:[#allocation2 + $0x208] sm:$0xff]
    %v316 = vld [vmem:[#allocation2 + $0x210] sm:$0xff]
    %v317 = vld [vmem:[#allocation2 + $0x218] sm:$0xff]
    %v318 = vld [vmem:[#allocation2 + $0x220] sm:$0xff]
    %v319 = vld [vmem:[#allocation2 + $0x228] sm:$0xff]
    %v320 = vld [vmem:[#allocation2 + $0x230] sm:$0xff]
    %v321 = vld [vmem:[#allocation2 + $0x238] sm:$0xff]
    %v322 = vld [vmem:[#allocation2 + $0x240] sm:$0xff]
    %v323 = vld [vmem:[#allocation2 + $0x248] sm:$0xff]
    %v324 = vld [vmem:[#allocation2 + $0x250] sm:$0xff]
    %v325 = vld [vmem:[#allocation2 + $0x258] sm:$0xff]
    %v326 = vld [vmem:[#allocation2 + $0x260] sm:$0xff]
    %v327 = vld [vmem:[#allocation2 + $0x268] sm:$0xff]
    %v328 = vld [vmem:[#allocation2 + $0x270] sm:$0xff]
    %v329 = vld [vmem:[#allocation2 + $0x278] sm:$0xff]
    %v330 = vld [vmem:[#allocation2 + $0x280] sm:$0xff]
    %v331 = vld [vmem:[#allocation2 + $0x288] sm:$0xff]
    %v332 = vld [vmem:[#allocation2 + $0x290] sm:$0xff]
    %v333 = vld [vmem:[#allocation2 + $0x298] sm:$0xff]
    %v334 = vld [vmem:[#allocation2 + $0x2a0] sm:$0xff]
    %v335 = vld [vmem:[#allocation2 + $0x2a8] sm:$0xff]
    %v336 = vld [vmem:[#allocation2 + $0x2b0] sm:$0xff]
    %v337 = vld [vmem:[#allocation2 + $0x2b8] sm:$0xff]
    %v338 = vld [vmem:[#allocation2 + $0x2c0] sm:$0xff]
    %v339 = vld [vmem:[#allocation2 + $0x2c8] sm:$0xff]
    %v340 = vld [vmem:[#allocation2 + $0x2d0] sm:$0xff]
    %v341 = vld [vmem:[#allocation2 + $0x2d8] sm:$0xff]
    %v342 = vld [vmem:[#allocation2 + $0x2e0] sm:$0xff]
    %v343 = vld [vmem:[#allocation2 + $0x2e8] sm:$0xff]
    %v344 = vld [vmem:[#allocation2 + $0x2f0] sm:$0xff]
    %v345 = vld [vmem:[#allocation2 + $0x2f8] sm:$0xff]
    %v346 = vld [vmem:[#allocation2 + $0x300] sm:$0xff]
    %v347 = vld [vmem:[#allocation2 + $0x308] sm:$0xff]
    %v348 = vld [vmem:[#allocation2 + $0x310] sm:$0xff]
    %v349 = vld [vmem:[#allocation2 + $0x318] sm:$0xff]
    %v350 = vld [vmem:[#allocation2 + $0x320] sm:$0xff]
    %v351 = vld [vmem:[#allocation2 + $0x328] sm:$0xff]
    %v352 = vld [vmem:[#allocation2 + $0x330] sm:$0xff]
    %v353 = vld [vmem:[#allocation2 + $0x338] sm:$0xff]
    %v354 = vld [vmem:[#allocation2 + $0x340] sm:$0xff]
    %v355 = vld [vmem:[#allocation2 + $0x348] sm:$0xff]
    %v356 = vld [vmem:[#allocation2 + $0x350] sm:$0xff]
    %v357 = vld [vmem:[#allocation2 + $0x358] sm:$0xff]
    %v358 = vld [vmem:[#allocation2 + $0x360] sm:$0xff]
    %v359 = vld [vmem:[#allocation2 + $0x368] sm:$0xff]
    %v360 = vld [vmem:[#allocation2 + $0x370] sm:$0xff]
    %v361 = vld [vmem:[#allocation2 + $0x378] sm:$0xff]
    %v362 = vld [vmem:[#allocation2 + $0x380] sm:$0xff]
    %v363 = vld [vmem:[#allocation2 + $0x388] sm:$0xff]
    %v364 = vld [vmem:[#allocation2 + $0x390] sm:$0xff]
    %v365 = vld [vmem:[#allocation2 + $0x398] sm:$0xff]
    %v366 = vld [vmem:[#allocation2 + $0x3a0] sm:$0xff]
    %v367 = vld [vmem:[#allocation2 + $0x3a8] sm:$0xff]
    %v368 = vld [vmem:[#allocation2 + $0x3b0] sm:$0xff]
    %v369 = vld [vmem:[#allocation2 + $0x3b8] sm:$0xff]
    %v370 = vld [vmem:[#allocation2 + $0x3c0] sm:$0xff]
    %v371 = vld [vmem:[#allocation2 + $0x3c8] sm:$0xff]
    %v372 = vld [vmem:[#allocation2 + $0x3d0] sm:$0xff]
    %v373 = vld [vmem:[#allocation2 + $0x3d8] sm:$0xff]
    %v374 = vld [vmem:[#allocation2 + $0x3e0] sm:$0xff]
    %v375 = vld [vmem:[#allocation2 + $0x3e8] sm:$0xff]
    %v376 = vld [vmem:[#allocation2 + $0x3f0] sm:$0xff]
    %v377 = vld [vmem:[#allocation2 + $0x3f8] sm:$0xff]
    %v379 = vlaneseq
    %v380 = vshrl.u32 %v379, 7
    %v381 = vsub.s32 0, %v380
    %v382 = vrot.slane %v65, %v381
    %v383 = vlaneseq
    %v384 = vshrl.u32 %v383, 7
    %v385 = vsub.s32 1, %v384
    %v386 = vrot.slane %v65, %v385
    %v387 = vlaneseq
    %v388 = vshrl.u32 %v387, 7
    %v389 = vsub.s32 2, %v388
    %v390 = vrot.slane %v65, %v389
    %v391 = vlaneseq
    %v392 = vshrl.u32 %v391, 7
    %v393 = vsub.s32 3, %v392
    %v394 = vrot.slane %v65, %v393
    %399 = vmatprep.subr.mxu0 %v251
    %400 = vmatpush1.msra.mxu0 %v250
    %401 = vmatprep.subr.mxu0 %v255
    %402 = vmatpush1.msra.mxu0 %v254
    %403 = vmatprep.subr.mxu0 %v259
    %404 = vmatpush1.msra.mxu0 %v258
    %405 = vmatprep.subr.mxu0 %v263
    %406 = vmatpush1.msra.mxu0 %v262
    %407 = vmatprep.subr.mxu0 %v267
    %408 = vmatpush1.msra.mxu0 %v266
    %409 = vmatprep.subr.mxu0 %v271
    %410 = vmatpush1.msra.mxu0 %v270
    %411 = vmatprep.subr.mxu0 %v275
    %412 = vmatpush1.msra.mxu0 %v274
    %413 = vmatprep.subr.mxu0 %v279
    %414 = vmatpush1.msra.mxu0 %v278
    %415 = vmatprep.subr.mxu0 %v283
    %416 = vmatpush1.msra.mxu0 %v282
    %417 = vmatprep.subr.mxu0 %v287
    %418 = vmatpush1.msra.mxu0 %v286
    %419 = vmatprep.subr.mxu0 %v291
    %420 = vmatpush1.msra.mxu0 %v290
    %421 = vmatprep.subr.mxu0 %v295
    %422 = vmatpush1.msra.mxu0 %v294
    %423 = vmatprep.subr.mxu0 %v299
    %424 = vmatpush1.msra.mxu0 %v298
    %425 = vmatprep.subr.mxu0 %v303
    %426 = vmatpush1.msra.mxu0 %v302
    %427 = vmatprep.subr.mxu0 %v307
    %428 = vmatpush1.msra.mxu0 %v306
    %429 = vmatprep.subr.mxu0 %v311
    %430 = vmatpush1.msra.mxu0 %v310
    %431 = vmatprep.subr.mxu0 %v315
    %432 = vmatpush1.msra.mxu0 %v314
    %433 = vmatprep.subr.mxu0 %v319
    %434 = vmatpush1.msra.mxu0 %v318
    %435 = vmatprep.subr.mxu0 %v323
    %436 = vmatpush1.msra.mxu0 %v322
    %437 = vmatprep.subr.mxu0 %v327
    %438 = vmatpush1.msra.mxu0 %v326
    %439 = vmatprep.subr.mxu0 %v331
    %440 = vmatpush1.msra.mxu0 %v330
    %441 = vmatprep.subr.mxu0 %v335
    %442 = vmatpush1.msra.mxu0 %v334
    %443 = vmatprep.subr.mxu0 %v339
    %444 = vmatpush1.msra.mxu0 %v338
    %445 = vmatprep.subr.mxu0 %v343
    %446 = vmatpush1.msra.mxu0 %v342
    %447 = vmatprep.subr.mxu0 %v347
    %448 = vmatpush1.msra.mxu0 %v346
    %449 = vmatprep.subr.mxu0 %v351
    %450 = vmatpush1.msra.mxu0 %v350
    %451 = vmatprep.subr.mxu0 %v355
    %452 = vmatpush1.msra.mxu0 %v354
    %453 = vmatprep.subr.mxu0 %v359
    %454 = vmatpush1.msra.mxu0 %v358
    %455 = vmatprep.subr.mxu0 %v363
    %456 = vmatpush1.msra.mxu0 %v362
    %457 = vmatprep.subr.mxu0 %v367
    %458 = vmatpush1.msra.mxu0 %v366
    %459 = vmatprep.subr.mxu0 %v371
    %460 = vmatpush1.msra.mxu0 %v370
    %461 = vmatprep.subr.mxu0 %v375
    %462 = vmatpush1.msra.mxu0 %v374
    %463 = vmatprep.mubr.f32.mxu0 %v249
    %464 = vmatmul.mubr.f32.gmra.mrb[0].mxu0 %v248
    %v465 = vpop.f32.mrb[0].mxu0
    %v466 = vadd.f32 %v382, %v465
    %v467 = vpop.f32.mrb[0].mxu0
    %v468 = vadd.f32 %v386, %v467
    %469 = vdwg.mxu0
    %470 = vmatprep.subr.mxu0 %v253
    %471 = vmatpush1.msra.mxu0 %v252
    %472 = vmatprep.subr.mxu0 %v257
    %473 = vmatpush1.msra.mxu0 %v256
    %474 = vmatprep.subr.mxu0 %v261
    %475 = vmatpush1.msra.mxu0 %v260
    %476 = vmatprep.subr.mxu0 %v265
    %477 = vmatpush1.msra.mxu0 %v264
    %478 = vmatprep.subr.mxu0 %v269
    %479 = vmatpush1.msra.mxu0 %v268
    %480 = vmatprep.subr.mxu0 %v273
    %481 = vmatpush1.msra.mxu0 %v272
    %482 = vmatprep.subr.mxu0 %v277
    %483 = vmatpush1.msra.mxu0 %v276
    %484 = vmatprep.subr.mxu0 %v281
    %485 = vmatpush1.msra.mxu0 %v280
    %486 = vmatprep.subr.mxu0 %v285
    %487 = vmatpush1.msra.mxu0 %v284
    %488 = vmatprep.subr.mxu0 %v289
    %489 = vmatpush1.msra.mxu0 %v288
    %490 = vmatprep.subr.mxu0 %v293
    %491 = vmatpush1.msra.mxu0 %v292
    %492 = vmatprep.subr.mxu0 %v297
    %493 = vmatpush1.msra.mxu0 %v296
    %494 = vmatprep.subr.mxu0 %v301
    %495 = vmatpush1.msra.mxu0 %v300
    %496 = vmatprep.subr.mxu0 %v305
    %497 = vmatpush1.msra.mxu0 %v304
    %498 = vmatprep.subr.mxu0 %v309
    %499 = vmatpush1.msra.mxu0 %v308
    %500 = vmatprep.subr.mxu0 %v313
    %501 = vmatpush1.msra.mxu0 %v312
    %502 = vmatprep.subr.mxu0 %v317
    %503 = vmatpush1.msra.mxu0 %v316
    %504 = vmatprep.subr.mxu0 %v321
    %505 = vmatpush1.msra.mxu0 %v320
    %506 = vmatprep.subr.mxu0 %v325
    %507 = vmatpush1.msra.mxu0 %v324
    %508 = vmatprep.subr.mxu0 %v329
    %509 = vmatpush1.msra.mxu0 %v328
    %510 = vmatprep.subr.mxu0 %v333
    %511 = vmatpush1.msra.mxu0 %v332
    %512 = vmatprep.subr.mxu0 %v337
    %513 = vmatpush1.msra.mxu0 %v336
    %514 = vmatprep.subr.mxu0 %v341
    %515 = vmatpush1.msra.mxu0 %v340
    %516 = vmatprep.subr.mxu0 %v345
    %517 = vmatpush1.msra.mxu0 %v344
    %518 = vmatprep.subr.mxu0 %v349
    %519 = vmatpush1.msra.mxu0 %v348
    %520 = vmatprep.subr.mxu0 %v353
    %521 = vmatpush1.msra.mxu0 %v352
    %522 = vmatprep.subr.mxu0 %v357
    %523 = vmatpush1.msra.mxu0 %v356
    %524 = vmatprep.subr.mxu0 %v361
    %525 = vmatpush1.msra.mxu0 %v360
    %526 = vmatprep.subr.mxu0 %v365
    %527 = vmatpush1.msra.mxu0 %v364
    %528 = vmatprep.subr.mxu0 %v369
    %529 = vmatpush1.msra.mxu0 %v368
    %530 = vmatprep.subr.mxu0 %v373
    %531 = vmatpush1.msra.mxu0 %v372
    %532 = vmatprep.subr.mxu0 %v377
    %533 = vmatpush1.msra.mxu0 %v376
    %534 = vmatprep.mubr.f32.mxu0 %v249
    %535 = vmatmul.mubr.f32.gmra.mrb[0].mxu0 %v248
    %v536 = vpop.f32.mrb[0].mxu0
    %v537 = vadd.f32 %v390, %v536
    %v538 = vpop.f32.mrb[0].mxu0
    %v539 = vadd.f32 %v394, %v538
    %540 = vdwg.mxu0
    %v541 = vld [vmem:[#allocation5] sm:$0xff]
    %v542 = vld [vmem:[#allocation5 + $0x8] sm:$0xff]
    %v543 = vld [vmem:[#allocation5 + $0x10] sm:$0xff]
    %v544 = vld [vmem:[#allocation5 + $0x18] sm:$0xff]
    %v545 = vld [vmem:[#allocation5 + $0x20] sm:$0xff]
    %v546 = vld [vmem:[#allocation5 + $0x28] sm:$0xff]
    %v547 = vld [vmem:[#allocation5 + $0x30] sm:$0xff]
    %v548 = vld [vmem:[#allocation5 + $0x38] sm:$0xff]
    %v549 = vld [vmem:[#allocation5 + $0x40] sm:$0xff]
    %v550 = vld [vmem:[#allocation5 + $0x48] sm:$0xff]
    %v551 = vld [vmem:[#allocation5 + $0x50] sm:$0xff]
    %v552 = vld [vmem:[#allocation5 + $0x58] sm:$0xff]
    %v553 = vld [vmem:[#allocation5 + $0x60] sm:$0xff]
    %v554 = vld [vmem:[#allocation5 + $0x68] sm:$0xff]
    %v555 = vld [vmem:[#allocation5 + $0x70] sm:$0xff]
    %v556 = vld [vmem:[#allocation5 + $0x78] sm:$0xff]
    %v557 = vld [vmem:[#allocation5 + $0x80] sm:$0xff]
    %v558 = vld [vmem:[#allocation5 + $0x88] sm:$0xff]
    %v559 = vld [vmem:[#allocation5 + $0x90] sm:$0xff]
    %v560 = vld [vmem:[#allocation5 + $0x98] sm:$0xff]
    %v561 = vld [vmem:[#allocation5 + $0xa0] sm:$0xff]
    %v562 = vld [vmem:[#allocation5 + $0xa8] sm:$0xff]
    %v563 = vld [vmem:[#allocation5 + $0xb0] sm:$0xff]
    %v564 = vld [vmem:[#allocation5 + $0xb8] sm:$0xff]
    %v565 = vld [vmem:[#allocation5 + $0xc0] sm:$0xff]
    %v566 = vld [vmem:[#allocation5 + $0xc8] sm:$0xff]
    %v567 = vld [vmem:[#allocation5 + $0xd0] sm:$0xff]
    %v568 = vld [vmem:[#allocation5 + $0xd8] sm:$0xff]
    %v569 = vld [vmem:[#allocation5 + $0xe0] sm:$0xff]
    %v570 = vld [vmem:[#allocation5 + $0xe8] sm:$0xff]
    %v571 = vld [vmem:[#allocation5 + $0xf0] sm:$0xff]
    %v572 = vld [vmem:[#allocation5 + $0xf8] sm:$0xff]
    %v573 = vld [vmem:[#allocation5 + $0x100] sm:$0xff]
    %v574 = vld [vmem:[#allocation5 + $0x108] sm:$0xff]
    %v575 = vld [vmem:[#allocation5 + $0x110] sm:$0xff]
    %v576 = vld [vmem:[#allocation5 + $0x118] sm:$0xff]
    %v577 = vld [vmem:[#allocation5 + $0x120] sm:$0xff]
    %v578 = vld [vmem:[#allocation5 + $0x128] sm:$0xff]
    %v579 = vld [vmem:[#allocation5 + $0x130] sm:$0xff]
    %v580 = vld [vmem:[#allocation5 + $0x138] sm:$0xff]
    %v581 = vld [vmem:[#allocation5 + $0x140] sm:$0xff]
    %v582 = vld [vmem:[#allocation5 + $0x148] sm:$0xff]
    %v583 = vld [vmem:[#allocation5 + $0x150] sm:$0xff]
    %v584 = vld [vmem:[#allocation5 + $0x158] sm:$0xff]
    %v585 = vld [vmem:[#allocation5 + $0x160] sm:$0xff]
    %v586 = vld [vmem:[#allocation5 + $0x168] sm:$0xff]
    %v587 = vld [vmem:[#allocation5 + $0x170] sm:$0xff]
    %v588 = vld [vmem:[#allocation5 + $0x178] sm:$0xff]
    %v589 = vld [vmem:[#allocation5 + $0x180] sm:$0xff]
    %v590 = vld [vmem:[#allocation5 + $0x188] sm:$0xff]
    %v591 = vld [vmem:[#allocation5 + $0x190] sm:$0xff]
    %v592 = vld [vmem:[#allocation5 + $0x198] sm:$0xff]
    %v593 = vld [vmem:[#allocation5 + $0x1a0] sm:$0xff]
    %v594 = vld [vmem:[#allocation5 + $0x1a8] sm:$0xff]
    %v595 = vld [vmem:[#allocation5 + $0x1b0] sm:$0xff]
    %v596 = vld [vmem:[#allocation5 + $0x1b8] sm:$0xff]
    %v597 = vld [vmem:[#allocation5 + $0x1c0] sm:$0xff]
    %v598 = vld [vmem:[#allocation5 + $0x1c8] sm:$0xff]
    %v599 = vld [vmem:[#allocation5 + $0x1d0] sm:$0xff]
    %v600 = vld [vmem:[#allocation5 + $0x1d8] sm:$0xff]
    %v601 = vld [vmem:[#allocation5 + $0x1e0] sm:$0xff]
    %v602 = vld [vmem:[#allocation5 + $0x1e8] sm:$0xff]
    %v603 = vld [vmem:[#allocation5 + $0x1f0] sm:$0xff]
    %v604 = vld [vmem:[#allocation5 + $0x1f8] sm:$0xff]
    %605 = vmatprep.subr.mxu0 0.0
    %606 = vmatpush1.msra.mxu0 %v541
    %607 = vmatprep.subr.mxu0 0.0
    %608 = vmatpush1.msra.mxu0 %v542
    %609 = vmatprep.subr.mxu0 0.0
    %610 = vmatpush1.msra.mxu0 %v543
    %611 = vmatprep.subr.mxu0 0.0
    %612 = vmatpush1.msra.mxu0 %v544
    %613 = vmatprep.subr.mxu0 0.0
    %614 = vmatpush1.msra.mxu0 %v545
    %615 = vmatprep.subr.mxu0 0.0
    %616 = vmatpush1.msra.mxu0 %v546
    %617 = vmatprep.subr.mxu0 0.0
    %618 = vmatpush1.msra.mxu0 %v547
    %619 = vmatprep.subr.mxu0 0.0
    %620 = vmatpush1.msra.mxu0 %v548
    %621 = vmatprep.subr.mxu0 0.0
    %622 = vmatpush1.msra.mxu0 %v549
    %623 = vmatprep.subr.mxu0 0.0
    %624 = vmatpush1.msra.mxu0 %v550
    %625 = vmatprep.subr.mxu0 0.0
    %626 = vmatpush1.msra.mxu0 %v551
    %627 = vmatprep.subr.mxu0 0.0
    %628 = vmatpush1.msra.mxu0 %v552
    %629 = vmatprep.subr.mxu0 0.0
    %630 = vmatpush1.msra.mxu0 %v553
    %631 = vmatprep.subr.mxu0 0.0
    %632 = vmatpush1.msra.mxu0 %v554
    %633 = vmatprep.subr.mxu0 0.0
    %634 = vmatpush1.msra.mxu0 %v555
    %635 = vmatprep.subr.mxu0 0.0
    %636 = vmatpush1.msra.mxu0 %v556
    %637 = vmatprep.subr.mxu0 0.0
    %638 = vmatpush1.msra.mxu0 %v557
    %639 = vmatprep.subr.mxu0 0.0
    %640 = vmatpush1.msra.mxu0 %v558
    %641 = vmatprep.subr.mxu0 0.0
    %642 = vmatpush1.msra.mxu0 %v559
    %643 = vmatprep.subr.mxu0 0.0
    %644 = vmatpush1.msra.mxu0 %v560
    %645 = vmatprep.subr.mxu0 0.0
    %646 = vmatpush1.msra.mxu0 %v561
    %647 = vmatprep.subr.mxu0 0.0
    %648 = vmatpush1.msra.mxu0 %v562
    %649 = vmatprep.subr.mxu0 0.0
    %650 = vmatpush1.msra.mxu0 %v563
    %651 = vmatprep.subr.mxu0 0.0
    %652 = vmatpush1.msra.mxu0 %v564
    %653 = vmatprep.subr.mxu0 0.0
    %654 = vmatpush1.msra.mxu0 %v565
    %655 = vmatprep.subr.mxu0 0.0
    %656 = vmatpush1.msra.mxu0 %v566
    %657 = vmatprep.subr.mxu0 0.0
    %658 = vmatpush1.msra.mxu0 %v567
    %659 = vmatprep.subr.mxu0 0.0
    %660 = vmatpush1.msra.mxu0 %v568
    %661 = vmatprep.subr.mxu0 0.0
    %662 = vmatpush1.msra.mxu0 %v569
    %663 = vmatprep.subr.mxu0 0.0
    %664 = vmatpush1.msra.mxu0 %v570
    %665 = vmatprep.subr.mxu0 0.0
    %666 = vmatpush1.msra.mxu0 %v571
    %667 = vmatprep.subr.mxu0 0.0
    %668 = vmatpush1.msra.mxu0 %v572
    %669 = vmatprep.mubr.f32.mxu0 %v468
    %670 = vmatmul.mubr.f32.gmra.mrb[0].mxu0 %v466
    %v671 = vpop.f32.mrb[0].mxu0
    %v672 = vadd.f32 %v66, %v671
    %v673 = vpop.f32.mrb[0].mxu0
    %674 = vdwg.mxu0
    %675 = vmatprep.subr.mxu0 0.0
    %676 = vmatpush1.msra.mxu0 %v573
    %677 = vmatprep.subr.mxu0 0.0
    %678 = vmatpush1.msra.mxu0 %v574
    %679 = vmatprep.subr.mxu0 0.0
    %680 = vmatpush1.msra.mxu0 %v575
    %681 = vmatprep.subr.mxu0 0.0
    %682 = vmatpush1.msra.mxu0 %v576
    %683 = vmatprep.subr.mxu0 0.0
    %684 = vmatpush1.msra.mxu0 %v577
    %685 = vmatprep.subr.mxu0 0.0
    %686 = vmatpush1.msra.mxu0 %v578
    %687 = vmatprep.subr.mxu0 0.0
    %688 = vmatpush1.msra.mxu0 %v579
    %689 = vmatprep.subr.mxu0 0.0
    %690 = vmatpush1.msra.mxu0 %v580
    %691 = vmatprep.subr.mxu0 0.0
    %692 = vmatpush1.msra.mxu0 %v581
    %693 = vmatprep.subr.mxu0 0.0
    %694 = vmatpush1.msra.mxu0 %v582
    %695 = vmatprep.subr.mxu0 0.0
    %696 = vmatpush1.msra.mxu0 %v583
    %697 = vmatprep.subr.mxu0 0.0
    %698 = vmatpush1.msra.mxu0 %v584
    %699 = vmatprep.subr.mxu0 0.0
    %700 = vmatpush1.msra.mxu0 %v585
    %701 = vmatprep.subr.mxu0 0.0
    %702 = vmatpush1.msra.mxu0 %v586
    %703 = vmatprep.subr.mxu0 0.0
    %704 = vmatpush1.msra.mxu0 %v587
    %705 = vmatprep.subr.mxu0 0.0
    %706 = vmatpush1.msra.mxu0 %v588
    %707 = vmatprep.subr.mxu0 0.0
    %708 = vmatpush1.msra.mxu0 %v589
    %709 = vmatprep.subr.mxu0 0.0
    %710 = vmatpush1.msra.mxu0 %v590
    %711 = vmatprep.subr.mxu0 0.0
    %712 = vmatpush1.msra.mxu0 %v591
    %713 = vmatprep.subr.mxu0 0.0
    %714 = vmatpush1.msra.mxu0 %v592
    %715 = vmatprep.subr.mxu0 0.0
    %716 = vmatpush1.msra.mxu0 %v593
    %717 = vmatprep.subr.mxu0 0.0
    %718 = vmatpush1.msra.mxu0 %v594
    %719 = vmatprep.subr.mxu0 0.0
    %720 = vmatpush1.msra.mxu0 %v595
    %721 = vmatprep.subr.mxu0 0.0
    %722 = vmatpush1.msra.mxu0 %v596
    %723 = vmatprep.subr.mxu0 0.0
    %724 = vmatpush1.msra.mxu0 %v597
    %725 = vmatprep.subr.mxu0 0.0
    %726 = vmatpush1.msra.mxu0 %v598
    %727 = vmatprep.subr.mxu0 0.0
    %728 = vmatpush1.msra.mxu0 %v599
    %729 = vmatprep.subr.mxu0 0.0
    %730 = vmatpush1.msra.mxu0 %v600
    %731 = vmatprep.subr.mxu0 0.0
    %732 = vmatpush1.msra.mxu0 %v601
    %733 = vmatprep.subr.mxu0 0.0
    %734 = vmatpush1.msra.mxu0 %v602
    %735 = vmatprep.subr.mxu0 0.0
    %736 = vmatpush1.msra.mxu0 %v603
    %737 = vmatprep.subr.mxu0 0.0
    %738 = vmatpush1.msra.mxu0 %v604
    %739 = vmatprep.mubr.f32.mxu0 %v539
    %740 = vmatmul.mubr.f32.gmra.mrb[0].mxu0 %v537
    %v741 = vpop.f32.mrb[0].mxu0
    %v742 = vadd.f32 %v672, %v741
    %v743 = vpop.f32.mrb[0].mxu0
    %744 = vdwg.mxu0
    %v745 = vld [vmem:[%s6] sm:$0xff]
    %v746 = vld [vmem:[%s6 + $0x8] sm:$0xff]
    %v747 = vld [vmem:[%s6 + $0x10] sm:$0xff]
    %v748 = vld [vmem:[%s6 + $0x18] sm:$0xff]
    %v749 = vld [vmem:[%s6 + $0x20] sm:$0xff]
    %v750 = vld [vmem:[%s6 + $0x28] sm:$0xff]
    %v751 = vld [vmem:[%s6 + $0x30] sm:$0xff]
    %v752 = vld [vmem:[%s6 + $0x38] sm:$0xff]
    %v753 = vld [vmem:[%s6 + $0x40] sm:$0xff]
    %v754 = vld [vmem:[%s6 + $0x48] sm:$0xff]
    %v755 = vld [vmem:[%s6 + $0x50] sm:$0xff]
    %v756 = vld [vmem:[%s6 + $0x58] sm:$0xff]
    %v757 = vld [vmem:[%s6 + $0x60] sm:$0xff]
    %v758 = vld [vmem:[%s6 + $0x68] sm:$0xff]
    %v759 = vld [vmem:[%s6 + $0x70] sm:$0xff]
    %v760 = vld [vmem:[%s6 + $0x78] sm:$0xff]
    %761 = vmatprep.subr.mxu0 0.0
    %762 = vmatpush1.msra.mxu0 %v745
    %763 = vmatprep.subr.mxu0 0.0
    %764 = vmatpush1.msra.mxu0 %v746
    %765 = vmatprep.subr.mxu0 0.0
    %766 = vmatpush1.msra.mxu0 %v747
    %767 = vmatprep.subr.mxu0 0.0
    %768 = vmatpush1.msra.mxu0 %v748
    %769 = vmatprep.subr.mxu0 0.0
    %770 = vmatpush1.msra.mxu0 %v749
    %771 = vmatprep.subr.mxu0 0.0
    %772 = vmatpush1.msra.mxu0 %v750
    %773 = vmatprep.subr.mxu0 0.0
    %774 = vmatpush1.msra.mxu0 %v751
    %775 = vmatprep.subr.mxu0 0.0
    %776 = vmatpush1.msra.mxu0 %v752
    %777 = vmatprep.subr.mxu0 0.0
    %778 = vmatpush1.msra.mxu0 %v753
    %779 = vmatprep.subr.mxu0 0.0
    %780 = vmatpush1.msra.mxu0 %v754
    %781 = vmatprep.subr.mxu0 0.0
    %782 = vmatpush1.msra.mxu0 %v755
    %783 = vmatprep.subr.mxu0 0.0
    %784 = vmatpush1.msra.mxu0 %v756
    %785 = vmatprep.subr.mxu0 0.0
    %786 = vmatpush1.msra.mxu0 %v757
    %787 = vmatprep.subr.mxu0 0.0
    %788 = vmatpush1.msra.mxu0 %v758
    %789 = vmatprep.subr.mxu0 0.0
    %790 = vmatpush1.msra.mxu0 %v759
    %791 = vmatprep.subr.mxu0 0.0
    %792 = vmatpush1.msra.mxu0 %v760
    %793 = vmatprep.subr.mxu0 0.0
    %794 = vmatpush1.msra.mxu0 0.0
    %795 = vmatprep.subr.mxu0 0.0
    %796 = vmatpush1.msra.mxu0 0.0
    %797 = vmatprep.subr.mxu0 0.0
    %798 = vmatpush1.msra.mxu0 0.0
    %799 = vmatprep.subr.mxu0 0.0
    %800 = vmatpush1.msra.mxu0 0.0
    %801 = vmatprep.subr.mxu0 0.0
    %802 = vmatpush1.msra.mxu0 0.0
    %803 = vmatprep.subr.mxu0 0.0
    %804 = vmatpush1.msra.mxu0 0.0
    %805 = vmatprep.subr.mxu0 0.0
    %806 = vmatpush1.msra.mxu0 0.0
    %807 = vmatprep.subr.mxu0 0.0
    %808 = vmatpush1.msra.mxu0 0.0
    %809 = vmatprep.subr.mxu0 0.0
    %810 = vmatpush1.msra.mxu0 0.0
    %811 = vmatprep.subr.mxu0 0.0
    %812 = vmatpush1.msra.mxu0 0.0
    %813 = vmatprep.subr.mxu0 0.0
    %814 = vmatpush1.msra.mxu0 0.0
    %815 = vmatprep.subr.mxu0 0.0
    %816 = vmatpush1.msra.mxu0 0.0
    %817 = vmatprep.subr.mxu0 0.0
    %818 = vmatpush1.msra.mxu0 0.0
    %819 = vmatprep.subr.mxu0 0.0
    %820 = vmatpush1.msra.mxu0 0.0
    %821 = vmatprep.subr.mxu0 0.0
    %822 = vmatpush1.msra.mxu0 0.0
    %823 = vmatprep.subr.mxu0 0.0
    %824 = vmatpush1.msra.mxu0 0.0
    %825 = vmatprep.mubr.f32.mxu0 0.0
    %826 = vmatmul.mubr.f32.gmra.mrb[0].mxu0 %v742
    %v827 = vpop.f32.mrb[0].mxu0
    %v828 = vadd.f32 %v67, %v827
    %v829 = vpop.f32.mrb[0].mxu0
    %830 = vdwg.mxu0
    %v831 = vld [vmem:[%s7] sm:$0xff]
    %v832 = vld [vmem:[%s7 + $0x8] sm:$0xff]
    %v833 = vld [vmem:[%s7 + $0x10] sm:$0xff]
    %v834 = vld [vmem:[%s7 + $0x18] sm:$0xff]
    %v835 = vld [vmem:[%s7 + $0x20] sm:$0xff]
    %v836 = vld [vmem:[%s7 + $0x28] sm:$0xff]
    %v837 = vld [vmem:[%s7 + $0x30] sm:$0xff]
    %v838 = vld [vmem:[%s7 + $0x38] sm:$0xff]
    %vm839 = vcmask 523264
    %v841 = vsel %vm839, %v828, 0
    %843 = vmatprep.subr.mxu0 0.0
    %844 = vmatpush1.msra.mxu0 %v831
    %845 = vmatprep.subr.mxu0 0.0
    %846 = vmatpush1.msra.mxu0 %v832
    %847 = vmatprep.subr.mxu0 0.0
    %848 = vmatpush1.msra.mxu0 %v833
    %849 = vmatprep.subr.mxu0 0.0
    %850 = vmatpush1.msra.mxu0 %v834
    %851 = vmatprep.subr.mxu0 0.0
    %852 = vmatpush1.msra.mxu0 %v835
    %853 = vmatprep.subr.mxu0 0.0
    %854 = vmatpush1.msra.mxu0 %v836
    %855 = vmatprep.subr.mxu0 0.0
    %856 = vmatpush1.msra.mxu0 %v837
    %857 = vmatprep.subr.mxu0 0.0
    %858 = vmatpush1.msra.mxu0 %v838
    %859 = vmatprep.subr.mxu0 0.0
    %860 = vmatpush1.msra.mxu0 0.0
    %861 = vmatprep.subr.mxu0 0.0
    %862 = vmatpush1.msra.mxu0 0.0
    %863 = vmatprep.subr.mxu0 0.0
    %864 = vmatpush1.msra.mxu0 0.0
    %865 = vmatprep.subr.mxu0 0.0
    %866 = vmatpush1.msra.mxu0 0.0
    %867 = vmatprep.subr.mxu0 0.0
    %868 = vmatpush1.msra.mxu0 0.0
    %869 = vmatprep.subr.mxu0 0.0
    %870 = vmatpush1.msra.mxu0 0.0
    %871 = vmatprep.subr.mxu0 0.0
    %872 = vmatpush1.msra.mxu0 0.0
    %873 = vmatprep.subr.mxu0 0.0
    %874 = vmatpush1.msra.mxu0 0.0
    %875 = vmatprep.subr.mxu0 0.0
    %876 = vmatpush1.msra.mxu0 0.0
    %877 = vmatprep.subr.mxu0 0.0
    %878 = vmatpush1.msra.mxu0 0.0
    %879 = vmatprep.subr.mxu0 0.0
    %880 = vmatpush1.msra.mxu0 0.0
    %881 = vmatprep.subr.mxu0 0.0
    %882 = vmatpush1.msra.mxu0 0.0
    %883 = vmatprep.subr.mxu0 0.0
    %884 = vmatpush1.msra.mxu0 0.0
    %885 = vmatprep.subr.mxu0 0.0
    %886 = vmatpush1.msra.mxu0 0.0
    %887 = vmatprep.subr.mxu0 0.0
    %888 = vmatpush1.msra.mxu0 0.0
    %889 = vmatprep.subr.mxu0 0.0
    %890 = vmatpush1.msra.mxu0 0.0
    %891 = vmatprep.subr.mxu0 0.0
    %892 = vmatpush1.msra.mxu0 0.0
    %893 = vmatprep.subr.mxu0 0.0
    %894 = vmatpush1.msra.mxu0 0.0
    %895 = vmatprep.subr.mxu0 0.0
    %896 = vmatpush1.msra.mxu0 0.0
    %897 = vmatprep.subr.mxu0 0.0
    %898 = vmatpush1.msra.mxu0 0.0
    %899 = vmatprep.subr.mxu0 0.0
    %900 = vmatpush1.msra.mxu0 0.0
    %901 = vmatprep.subr.mxu0 0.0
    %902 = vmatpush1.msra.mxu0 0.0
    %903 = vmatprep.subr.mxu0 0.0
    %904 = vmatpush1.msra.mxu0 0.0
    %905 = vmatprep.subr.mxu0 0.0
    %906 = vmatpush1.msra.mxu0 0.0
    %907 = vmatprep.mubr.f32.mxu0 0.0
    %908 = vmatmul.mubr.f32.gmra.mrb[0].mxu0 %v841
    %v909 = vpop.f32.mrb[0].mxu0
    %v910 = vadd.f32 %v68, %v909
    %v911 = vpop.f32.mrb[0].mxu0
    %912 = vdwg.mxu0
    %vm913 = vcmask 90112
    %914 = vst.msk [vmem:[#allocation7] sm:$0x1] %vm913, %v910
    // Predicated region
    $region46: #{tpu_custom_call.1} parent=1 // pred_check
      _
    $region47: #{tpu_custom_call.1} parent=1 // pred_check_branch
      %916 = sbr.rel (0) target = $region49
    $region48: #{tpu_custom_call.1} parent=1 // pred_region
      %s918 = ssub.s32 16, 16
      %919 = vsyncadd [#allocation4], %s918
      %s921 = sshll.u32 [#allocation7], 4
      %s922 = int_to_ptr.vmem [resolvable:$true] %s921
      %924 = dma.vmem_to_hbm [thread:$0]  %s922, 16, %s9, [#allocation4]
    $region49: #{tpu_custom_call.1} parent=1 // pred_fallthru
      _
    // Predicated region
    $region50: #{tpu_custom_call.1} parent=1 // pred_check
      _
    $region51: #{tpu_custom_call.1} parent=1 // pred_check_branch
      %926 = sbr.rel (0) target = $region53
    $region52: #{tpu_custom_call.1} parent=1 // pred_region
      %927 = dma.done [#allocation4], 16
    $region53: #{tpu_custom_call.1} parent=1 // pred_fallthru
      _
    %928 = vsyncpa [#allocation3], 1
    %929 = vsyncpa [#allocation6], 1
    %930 = vsyncpa [#allocation4], 1

</llo_original>
